<compile_context>
chip_gen: v7x
topology: tpu7x:2x2x1
jax: 0.10.0
libtpu: 0.0.40
codegen_flags: <defaults>
</compile_context>

<pallas_src>
import functools

import numpy as np
import jax
import jax.numpy as jnp
from jax.experimental import pallas as pl
from jax.experimental.pallas import tpu as pltpu

EPS = 1e-5


def _round_up(a, b):
    return (a + b - 1) // b * b


def _batch_norm_kernel(x_ref, o_ref, *, n):
    """x_ref/o_ref: (TB, Dp) tile; each row is one full (zero-padded) sample."""
    xf = x_ref[...].astype(jnp.float32)            # f32 stats regardless of input dtype
    # One pass over the tile: sum and sum-of-squares together.
    s = jnp.sum(xf, axis=-1, keepdims=True)
    sq = jnp.sum(xf * xf, axis=-1, keepdims=True)
    mean = s * (1.0 / n)
    # Unbiased variance (ddof = 1); eps added to var before sqrt, as in torch.
    # NOTE: n == 1 divides by zero, matching torch's unbiased-var NaN behaviour.
    var = (sq - mean * s) * (1.0 / (n - 1))
    inv_std = jax.lax.rsqrt(var + EPS)             # EUP rsqrt, no VPU divide
    o_ref[...] = ((xf - mean) * inv_std).astype(o_ref.dtype)


def batch_norm(x):
    """Per-sample normalization over all non-batch dims (== BatchNorm.forward)."""
    orig_shape = x.shape
    bs = orig_shape[0]
    d = int(np.prod(orig_shape[1:]))
    itemsize = jnp.dtype(x.dtype).itemsize

    xr = x.reshape(bs, d)
    # Lane-dense padded feature dim: zero padding does not change sum / sumsq,
    # so the kernel just divides by the true n = d.
    dp = _round_up(d, 128)
    if dp != d:
        xr = jnp.pad(xr, ((0, 0), (0, dp - d)))

    # Tile rows: multiple of the sublane packing for the dtype, sized so the
    # double-buffered input + output tiles stay well inside the default scoped
    # VMEM on every TPU generation (v5e 16 MiB / v6e 32 MiB / v7x 32 of 64 MiB).
    pack = {4: 8, 2: 16, 1: 32}.get(itemsize, 8)
    max_tile_bytes = 2 * 1024 * 1024               # per tile buffer (~8 MiB live total)
    rows = max(pack, (max_tile_bytes // max(dp * itemsize, 1)) // pack * pack)
    rows = min(rows, max(_round_up(bs, pack), pack), 1024)
    # TODO(synk): if a single sample (dp * itemsize) exceeds the tile budget, add a
    # trailing "arbitrary" grid axis over D with scratch sum/sumsq accumulators and
    # a pl.when finalize (needed for very large C*H*W, esp. on v7x's 64 MiB VMEM).

    n_total = bs * d
    out = pl.pallas_call(
        functools.partial(_batch_norm_kernel, n=d),
        out_shape=jax.ShapeDtypeStruct((bs, dp), x.dtype),
        grid=(pl.cdiv(bs, rows),),
        in_specs=[pl.BlockSpec((rows, dp), lambda i: (i, 0))],
        out_specs=pl.BlockSpec((rows, dp), lambda i: (i, 0)),
        compiler_params=pltpu.CompilerParams(
            dimension_semantics=("parallel",)),
        cost_estimate=pl.CostEstimate(
            flops=5 * n_total,
            transcendentals=bs,
            bytes_accessed=2 * n_total * itemsize),
    )(xr)

    if dp != d:
        out = out[:, :d]
    return out.reshape(orig_shape)


def _reference(x, eps=EPS):
    bs = x.shape[0]
    xf = x.reshape(bs, -1).astype(jnp.float32)
    mean = jnp.mean(xf, axis=-1)
    var = jnp.var(xf, axis=-1, ddof=1) + eps
    std = jnp.sqrt(var)
    bshape = (bs,) + (1,) * (x.ndim - 1)
    return ((x.astype(jnp.float32) - mean.reshape(bshape)) / std.reshape(bshape)
            ).astype(x.dtype)


if __name__ == "__main__":
    key = jax.random.PRNGKey(0)
    fwd = jax.jit(batch_norm)

    # Same layout as the PyTorch module would see: (bs, C, H, W).
    x = jax.random.normal(key, (2, 4, 16, 16), jnp.float32)
    out = fwd(x)
    jax.block_until_ready(out)
    assert out.shape == x.shape, out.shape
    assert bool(jnp.all(jnp.isfinite(out)))
    ref = _reference(x)
    assert bool(jnp.allclose(out, ref, atol=1e-4, rtol=1e-4)), \
        float(jnp.max(jnp.abs(out - ref)))

    # Extra sanity check: feature size not a multiple of 128 (exercises padding).
    x2 = jax.random.normal(jax.random.PRNGKey(1), (3, 3, 5, 7), jnp.float32)
    out2 = jax.jit(batch_norm)(x2)
    jax.block_until_ready(out2)
    ref2 = _reference(x2)
    assert bool(jnp.allclose(out2, ref2, atol=1e-4, rtol=1e-4)), \
        float(jnp.max(jnp.abs(out2 - ref2)))

    print("KERNEL_OK")
</pallas_src>

<mosaic_0001>
module attributes {stable_mosaic.version = 11 : i64} {
  func.func @_batch_norm_kernel(%arg0: i32, %arg1: memref<8x1024xf32, #tpu.memory_space<vmem>>, %arg2: memref<8x1024xf32, #tpu.memory_space<vmem>>) attributes {dimension_semantics = [#tpu.dimension_semantics<parallel>], iteration_bounds = array<i64: 1>, scalar_prefetch = 0 : i64, scratch_operands = 0 : i64, tpu.core_type = #tpu.core_type<tc>, window_params = [{transform_indices = @transform_0, window_bounds = array<i64: 8, 1024>}, {transform_indices = @transform_1, window_bounds = array<i64: 8, 1024>}]} {
    %c0 = arith.constant 0 : index
    %c0_0 = arith.constant 0 : index
    %0 = vector.load %arg1[%c0, %c0_0] : memref<8x1024xf32, #tpu.memory_space<vmem>>, vector<8x1024xf32>
    %cst = arith.constant dense<0.000000e+00> : vector<8xf32>
    %1 = vector.multi_reduction <add>, %0, %cst [1] : vector<8x1024xf32> to vector<8xf32>
    %2 = vector.shape_cast %1 : vector<8xf32> to vector<8x1xf32>
    %3 = arith.mulf %0, %0 : vector<8x1024xf32>
    %cst_1 = arith.constant dense<0.000000e+00> : vector<8xf32>
    %4 = vector.multi_reduction <add>, %3, %cst_1 [1] : vector<8x1024xf32> to vector<8xf32>
    %5 = vector.shape_cast %4 : vector<8xf32> to vector<8x1xf32>
    %cst_2 = arith.constant 9.765625E-4 : f32
    %6 = vector.broadcast %cst_2 : f32 to vector<8x1xf32>
    %7 = arith.mulf %2, %6 : vector<8x1xf32>
    %8 = arith.mulf %7, %2 : vector<8x1xf32>
    %9 = arith.subf %5, %8 : vector<8x1xf32>
    %cst_3 = arith.constant 9.77517105E-4 : f32
    %10 = vector.broadcast %cst_3 : f32 to vector<8x1xf32>
    %11 = arith.mulf %9, %10 : vector<8x1xf32>
    %cst_4 = arith.constant 9.99999974E-6 : f32
    %12 = vector.broadcast %cst_4 : f32 to vector<8x1xf32>
    %13 = arith.addf %11, %12 : vector<8x1xf32>
    %14 = math.rsqrt %13 : vector<8x1xf32>
    %15 = vector.broadcast %7 : vector<8x1xf32> to vector<8x1024xf32>
    %16 = arith.subf %0, %15 : vector<8x1024xf32>
    %17 = vector.broadcast %14 : vector<8x1xf32> to vector<8x1024xf32>
    %18 = arith.mulf %16, %17 : vector<8x1024xf32>
    %c0_5 = arith.constant 0 : index
    %c0_6 = arith.constant 0 : index
    %19 = vector.load %arg2[%c0_5, %c0_6] : memref<8x1024xf32, #tpu.memory_space<vmem>>, vector<8x1024xf32>
    tpu.vector_store %arg2[%c0_5, %c0_6], %18 {strides = array<i32>} : memref<8x1024xf32, #tpu.memory_space<vmem>>, vector<8x1024xf32>,
    return
  }
  func.func @transform_0(%arg0: i32) -> (i32, i32) {
    %c0_i32 = arith.constant 0 : i32
    %c0_i32_0 = arith.constant 0 : i32
    return %arg0, %c0_i32 : i32, i32
  }
  func.func @transform_1(%arg0: i32) -> (i32, i32) {
    %c0_i32 = arith.constant 0 : i32
    %c0_i32_0 = arith.constant 0 : i32
    return %arg0, %c0_i32 : i32, i32
  }
}

</mosaic_0001>

<llo_original>
// kernel: batch_norm.1
$region0: #{batch_norm.1}
  #allocation0 [shape = 'u32[]', space=smem, size = 0x4, offset = 0x4, fixed_abs, tag = 'smem constant byte address 0x4 - core index']
  #allocation1 [shape = 'u32[144,128]{1,0:T(1,128)}', space=vmem, size = 0x12000, scoped, tag = 'internal scratch']
  %s0 = inlined_call_operand.vmem [shape: f32[2,1024], index: 0, kind: input, shape index: {}]
  %s1 = inlined_call_operand.vmem [shape: f32[2,1024], index: 1, kind: output, shape index: {}]
  %s2 = sld [smem:[#allocation0]]
  $region33: #{batch_norm.1} parent=0
    _
  %s4 = ssub.s32 1, %s2
  %s5 = scalar_select 0, %s4, %s2
  $region1: #{batch_norm.1} parent=0
    #allocation2 [shape = 'u8[32768]{0}', space=vmem, size = 0x8000, scoped, tag = 'output window, operand 0, single buffered']
    // Predicated region
    $region2: #{batch_norm.1} parent=1 // pred_check
      _
    $region3: #{batch_norm.1} parent=1 // pred_check_branch
      %7 = sbr.rel (0) target = $region5
    $region4: #{batch_norm.1} parent=1 // pred_region
      _
    $region5: #{batch_norm.1} parent=1 // pred_fallthru
      _
    %v8 = vld [vmem:[%s0] sm:$0xff]
    %v9 = vld [vmem:[%s0 + $0x8] sm:$0xff]
    %v10 = vld [vmem:[%s0 + $0x10] sm:$0xff]
    %v11 = vld [vmem:[%s0 + $0x18] sm:$0xff]
    %v12 = vld [vmem:[%s0 + $0x20] sm:$0xff]
    %v13 = vld [vmem:[%s0 + $0x28] sm:$0xff]
    %v14 = vld [vmem:[%s0 + $0x30] sm:$0xff]
    %v15 = vld [vmem:[%s0 + $0x38] sm:$0xff]
    %v24 = vcombine.low %v8, %v10
    %v25 = vcombine.high %v8, %v10
    %v26 = vcombine.low %v12, %v14
    %v27 = vcombine.high %v12, %v14
    %v29 = vunpack.c.l.s4 1983009808
    %v30 = vunpack.c.0.s8 %v29
    %v31 = vlaneseq
    %v32 = vshrl.u32 %v31, 7
    %v33 = vsub.s32 %v30, %v32
    %v34 = vrot.slane %v24, %v33
    %v36 = vunpack.c.l.s4 1983009808
    %v37 = vunpack.c.0.s8 %v36
    %v38 = vlaneseq
    %v39 = vshrl.u32 %v38, 7
    %v40 = vsub.s32 %v37, %v39
    %v41 = vrot.slane %v25, %v40
    %v43 = vunpack.c.l.s4 1983009808
    %v44 = vunpack.c.0.s8 %v43
    %v45 = vlaneseq
    %v46 = vshrl.u32 %v45, 7
    %v47 = vsub.s32 %v44, %v46
    %v48 = vrot.slane %v26, %v47
    %v50 = vunpack.c.l.s4 1983009808
    %v51 = vunpack.c.0.s8 %v50
    %v52 = vlaneseq
    %v53 = vshrl.u32 %v52, 7
    %v54 = vsub.s32 %v51, %v53
    %v55 = vrot.slane %v27, %v54
    %v56 = vcombine.low %v34, %v48
    %v57 = vcombine.high %v34, %v48
    %v58 = vcombine.low %v41, %v55
    %v59 = vcombine.high %v41, %v55
    %v60 = vcombine.low %v9, %v11
    %v61 = vcombine.high %v9, %v11
    %v62 = vcombine.low %v13, %v15
    %v63 = vcombine.high %v13, %v15
    %v65 = vunpack.c.l.s4 1983009808
    %v66 = vunpack.c.0.s8 %v65
    %v67 = vlaneseq
    %v68 = vshrl.u32 %v67, 7
    %v69 = vsub.s32 %v66, %v68
    %v70 = vrot.slane %v60, %v69
    %v72 = vunpack.c.l.s4 1983009808
    %v73 = vunpack.c.0.s8 %v72
    %v74 = vlaneseq
    %v75 = vshrl.u32 %v74, 7
    %v76 = vsub.s32 %v73, %v75
    %v77 = vrot.slane %v61, %v76
    %v79 = vunpack.c.l.s4 1983009808
    %v80 = vunpack.c.0.s8 %v79
    %v81 = vlaneseq
    %v82 = vshrl.u32 %v81, 7
    %v83 = vsub.s32 %v80, %v82
    %v84 = vrot.slane %v62, %v83
    %v86 = vunpack.c.l.s4 1983009808
    %v87 = vunpack.c.0.s8 %v86
    %v88 = vlaneseq
    %v89 = vshrl.u32 %v88, 7
    %v90 = vsub.s32 %v87, %v89
    %v91 = vrot.slane %v63, %v90
    %v92 = vcombine.low %v70, %v84
    %v93 = vcombine.high %v70, %v84
    %v94 = vcombine.low %v77, %v91
    %v95 = vcombine.high %v77, %v91
    %v104 = vadd.f32 %v56, %v57
    %v105 = vadd.f32 %v104, %v58
    %v106 = vadd.f32 %v105, %v59
    %v107 = vadd.f32 %v106, %v92
    %v108 = vadd.f32 %v107, %v93
    %v109 = vadd.f32 %v108, %v94
    %v110 = vadd.f32 %v109, %v95
    %111 = vadd.xlane.f32.xlu0 %v110
    %v112 = vpop.xlane.xlu0 %111
    %v113 = vmul.f32 %v8, %v8
    %v114 = vmul.f32 %v9, %v9
    %v115 = vmul.f32 %v10, %v10
    %v116 = vmul.f32 %v11, %v11
    %v117 = vmul.f32 %v12, %v12
    %v118 = vmul.f32 %v13, %v13
    %v119 = vmul.f32 %v14, %v14
    %v120 = vmul.f32 %v15, %v15
    %v129 = vcombine.low %v113, %v115
    %v130 = vcombine.high %v113, %v115
    %v131 = vcombine.low %v117, %v119
    %v132 = vcombine.high %v117, %v119
    %v134 = vunpack.c.l.s4 1983009808
    %v135 = vunpack.c.0.s8 %v134
    %v136 = vlaneseq
    %v137 = vshrl.u32 %v136, 7
    %v138 = vsub.s32 %v135, %v137
    %v139 = vrot.slane %v129, %v138
    %v141 = vunpack.c.l.s4 1983009808
    %v142 = vunpack.c.0.s8 %v141
    %v143 = vlaneseq
    %v144 = vshrl.u32 %v143, 7
    %v145 = vsub.s32 %v142, %v144
    %v146 = vrot.slane %v130, %v145
    %v148 = vunpack.c.l.s4 1983009808
    %v149 = vunpack.c.0.s8 %v148
    %v150 = vlaneseq
    %v151 = vshrl.u32 %v150, 7
    %v152 = vsub.s32 %v149, %v151
    %v153 = vrot.slane %v131, %v152
    %v155 = vunpack.c.l.s4 1983009808
    %v156 = vunpack.c.0.s8 %v155
    %v157 = vlaneseq
    %v158 = vshrl.u32 %v157, 7
    %v159 = vsub.s32 %v156, %v158
    %v160 = vrot.slane %v132, %v159
    %v161 = vcombine.low %v139, %v153
    %v162 = vcombine.high %v139, %v153
    %v163 = vcombine.low %v146, %v160
    %v164 = vcombine.high %v146, %v160
    %v165 = vcombine.low %v114, %v116
    %v166 = vcombine.high %v114, %v116
    %v167 = vcombine.low %v118, %v120
    %v168 = vcombine.high %v118, %v120
    %v170 = vunpack.c.l.s4 1983009808
    %v171 = vunpack.c.0.s8 %v170
    %v172 = vlaneseq
    %v173 = vshrl.u32 %v172, 7
    %v174 = vsub.s32 %v171, %v173
    %v175 = vrot.slane %v165, %v174
    %v177 = vunpack.c.l.s4 1983009808
    %v178 = vunpack.c.0.s8 %v177
    %v179 = vlaneseq
    %v180 = vshrl.u32 %v179, 7
    %v181 = vsub.s32 %v178, %v180
    %v182 = vrot.slane %v166, %v181
    %v184 = vunpack.c.l.s4 1983009808
    %v185 = vunpack.c.0.s8 %v184
    %v186 = vlaneseq
    %v187 = vshrl.u32 %v186, 7
    %v188 = vsub.s32 %v185, %v187
    %v189 = vrot.slane %v167, %v188
    %v191 = vunpack.c.l.s4 1983009808
    %v192 = vunpack.c.0.s8 %v191
    %v193 = vlaneseq
    %v194 = vshrl.u32 %v193, 7
    %v195 = vsub.s32 %v192, %v194
    %v196 = vrot.slane %v168, %v195
    %v197 = vcombine.low %v175, %v189
    %v198 = vcombine.high %v175, %v189
    %v199 = vcombine.low %v182, %v196
    %v200 = vcombine.high %v182, %v196
    %v209 = vadd.f32 %v161, %v162
    %v210 = vadd.f32 %v209, %v163
    %v211 = vadd.f32 %v210, %v164
    %v212 = vadd.f32 %v211, %v197
    %v213 = vadd.f32 %v212, %v198
    %v214 = vadd.f32 %v213, %v199
    %v215 = vadd.f32 %v214, %v200
    %216 = vadd.xlane.f32.xlu0 %v215
    %v217 = vpop.xlane.xlu0 %216
    %v218 = vmul.f32 %v112, 0.0009765625
    %v219 = vmul.f32 %v218, %v112
    %v220 = vsub.f32 %v217, %v219
    %v221 = vmul.f32 %v220, 0.0009775171
    %v222 = vadd.f32 %v221, 1e-05
    %v223 = vrsqrt.pop %v222
    %v226 = vunpack.c.l.s4 269488144
    %v227 = vunpack.c.0.s8 %v226
    %v228 = vlaneseq
    %v229 = vshrl.u32 %v228, 7
    %v230 = vsub.s32 %v227, %v229
    %v231 = vrot.slane %v218, %v230
    %v233 = vunpack.c.l.s4 842150450
    %v234 = vunpack.c.0.s8 %v233
    %v235 = vlaneseq
    %v236 = vshrl.u32 %v235, 7
    %v237 = vsub.s32 %v234, %v236
    %v238 = vrot.slane %v218, %v237
    %v240 = vunpack.c.l.s4 1414812756
    %v241 = vunpack.c.0.s8 %v240
    %v242 = vlaneseq
    %v243 = vshrl.u32 %v242, 7
    %v244 = vsub.s32 %v241, %v243
    %v245 = vrot.slane %v218, %v244
    %v247 = vunpack.c.l.s4 1987475062
    %v248 = vunpack.c.0.s8 %v247
    %v249 = vlaneseq
    %v250 = vshrl.u32 %v249, 7
    %v251 = vsub.s32 %v248, %v250
    %v252 = vrot.slane %v218, %v251
    %v257 = vsub.f32 %v8, %v231
    %v258 = vsub.f32 %v9, %v231
    %v259 = vsub.f32 %v10, %v238
    %v260 = vsub.f32 %v11, %v238
    %v261 = vsub.f32 %v12, %v245
    %v262 = vsub.f32 %v13, %v245
    %v263 = vsub.f32 %v14, %v252
    %v264 = vsub.f32 %v15, %v252
    %v267 = vunpack.c.l.s4 269488144
    %v268 = vunpack.c.0.s8 %v267
    %v269 = vlaneseq
    %v270 = vshrl.u32 %v269, 7
    %v271 = vsub.s32 %v268, %v270
    %v272 = vrot.slane %v223, %v271
    %v274 = vunpack.c.l.s4 842150450
    %v275 = vunpack.c.0.s8 %v274
    %v276 = vlaneseq
    %v277 = vshrl.u32 %v276, 7
    %v278 = vsub.s32 %v275, %v277
    %v279 = vrot.slane %v223, %v278
    %v281 = vunpack.c.l.s4 1414812756
    %v282 = vunpack.c.0.s8 %v281
    %v283 = vlaneseq
    %v284 = vshrl.u32 %v283, 7
    %v285 = vsub.s32 %v282, %v284
    %v286 = vrot.slane %v223, %v285
    %v288 = vunpack.c.l.s4 1987475062
    %v289 = vunpack.c.0.s8 %v288
    %v290 = vlaneseq
    %v291 = vshrl.u32 %v290, 7
    %v292 = vsub.s32 %v289, %v291
    %v293 = vrot.slane %v223, %v292
    %v298 = vmul.f32 %v257, %v272
    %v299 = vmul.f32 %v258, %v272
    %v300 = vmul.f32 %v259, %v279
    %v301 = vmul.f32 %v260, %v279
    %v302 = vmul.f32 %v261, %v286
    %v303 = vmul.f32 %v262, %v286
    %v304 = vmul.f32 %v263, %v293
    %v305 = vmul.f32 %v264, %v293
    %306 = vst [vmem:[#allocation2] sm:$0xff] %v298
    %307 = vst [vmem:[#allocation2 + $0x8] sm:$0xff] %v299
    %308 = vst [vmem:[#allocation2 + $0x10] sm:$0xff] %v300
    %309 = vst [vmem:[#allocation2 + $0x18] sm:$0xff] %v301
    %310 = vst [vmem:[#allocation2 + $0x20] sm:$0xff] %v302
    %311 = vst [vmem:[#allocation2 + $0x28] sm:$0xff] %v303
    %312 = vst [vmem:[#allocation2 + $0x30] sm:$0xff] %v304
    %313 = vst [vmem:[#allocation2 + $0x38] sm:$0xff] %v305
    // Predicated region
    $region6: #{batch_norm.1} parent=1 // pred_check
      _
    $region7: #{batch_norm.1} parent=1 // pred_check_branch
      %315 = sbr.rel (0) target = $region9
    $region8: #{batch_norm.1} parent=1 // pred_region
      // Predicated region
      $region10: #{batch_norm.1} parent=8 // pred_check
        _
      $region11: #{batch_norm.1} parent=8 // pred_check_branch
        %317 = sbr.rel (0) target = $region13
      $region12: #{batch_norm.1} parent=8 // pred_region
        // Predicated region
        $region14: #{batch_norm.1} parent=12 // pred_check
          _
        $region15: #{batch_norm.1} parent=12 // pred_check_branch
          %319 = sbr.rel (0) target = $region17
        $region16: #{batch_norm.1} parent=12 // pred_region
          loop: start=0, step=1, limit=1
          $region18: #{batch_norm.1} parent=16 // loop_pre_header
            _
          $region19: #{batch_norm.1} parent=16 // loop_header
            %s321 = sphi 0, %s325
            %p322 = scmp.ge.s32.totalorder %s321, 1
            %s326 = sphi [#allocation2], [#allocation2]
            %s327 = sphi %s1, %s1
          $region20: #{batch_norm.1} parent=16 // loop_header_branch
            %324 = sbr.rel (%p322) target = $region24
          $region21: #{batch_norm.1} parent=16 // loop_body
            %v328 = vld [vmem:[%s326] sm:$0xff]
            %329 = vst [vmem:[%s327] sm:$0xff] %v328
            %v330 = vld [vmem:[%s326 + $0x8] sm:$0xff]
            %331 = vst [vmem:[%s327 + $0x8] sm:$0xff] %v330
          $region22: #{batch_norm.1} parent=16 // loop_footer
            %s325 = sadd.s32 1, %s321
          $region23: #{batch_norm.1} parent=16 // loop_footer_branch
            %320 = sbr.rel target = $region19
          $region24: #{batch_norm.1} parent=16 // loop_exit
            _
        $region17: #{batch_norm.1} parent=12 // pred_fallthru
          _
        // Predicated region
        $region25: #{batch_norm.1} parent=12 // pred_check
          _
        $region26: #{batch_norm.1} parent=12 // pred_check_branch
          %333 = sbr.rel target = $region28
        $region27: #{batch_norm.1} parent=12 // pred_region
          _
        $region28: #{batch_norm.1} parent=12 // pred_fallthru
          _
      $region13: #{batch_norm.1} parent=8 // pred_fallthru
        _
      %334 = vnop
    $region9: #{batch_norm.1} parent=1 // pred_fallthru
      _
    // Predicated region
    $region29: #{batch_norm.1} parent=1 // pred_check
      _
    $region30: #{batch_norm.1} parent=1 // pred_check_branch
      %336 = sbr.rel (0) target = $region32
    $region31: #{batch_norm.1} parent=1 // pred_region
      _
    $region32: #{batch_norm.1} parent=1 // pred_fallthru
      _

</llo_original>
